<compile_context>
chip_gen: v5e
topology: v5e:2x2
jax: 0.10.0
libtpu: 0.0.40
codegen_flags: <defaults>
</compile_context>

<pallas_src>
import functools

import jax
import jax.numpy as jnp
from jax import lax
from jax.experimental import pallas as pl
from jax.experimental.pallas import tpu as pltpu


def _round_up(v, m):
    return -(-v // m) * m


def _cdiv(a, b):
    return -(-a // b)


def _mlp_kernel(x_ref, w1_ref, b1_ref, w2_ref, b2_ref, w3t_ref, b3_ref, o_ref,
                *, compute_dtype):
    # x tile arrives in native [tb, K]; cast to the MXU dtype in-kernel so the
    # wrapper never makes a separate transpose/cast pass over HBM.
    x = x_ref[...].astype(compute_dtype)                          # [tb, K]

    # Layer 1:  z1 = W1 . x^T  -> [H1, tb]   (A.B^T contraction, batch on lanes)
    z1 = lax.dot_general(w1_ref[...], x, (((1,), (1,)), ((), ())),
                         preferred_element_type=jnp.float32) + b1_ref[...]
    h1 = jnp.tanh(z1).astype(compute_dtype)                       # [H1, tb]

    # Layer 2:  z2 = W2 . h1  -> [H2, tb]
    z2 = jnp.dot(w2_ref[...], h1,
                 preferred_element_type=jnp.float32) + b2_ref[...]
    h2 = jnp.tanh(z2)                                             # [H2, tb] f32

    # Layer 3:  z3 = h2^T . W3^T -> [tb, C]   (A^T.B contraction, kept in f32:
    # smallest matmul, best-supported layout path, and it writes the output
    # directly in natural [batch, C] order -- no wrapper transpose needed).
    z3 = lax.dot_general(h2, w3t_ref[...], (((0,), (0,)), ((), ())),
                         preferred_element_type=jnp.float32) + b3_ref[...]
    o_ref[...] = z3.astype(o_ref.dtype)


def _select_tiles(B, tb_max):
    """Pick (batch_tile, padded_batch).

    Small batches: one tile (rounded to 8, or 128 once lane-density matters).
    Large batches: tiles are multiples of 128 (lane-dense intermediates), the
    grid has an even number of steps and >= 4 of them (>= 2 per v7x core), and
    the tile is as large as the cap allows to amortize per-step overhead.
    """
    if B <= 1024:
        t = _round_up(B, 8) if B <= 128 else _round_up(B, 128)
        return t, t
    cap = max(128, min(_round_up(tb_max, 128), 8192))
    steps = 4
    while _round_up(_cdiv(B, steps), 128) > cap:
        steps += 2
    t = _round_up(_cdiv(B, steps), 128)
    return t, steps * t


def net_qc_w_forward(x, params, *, tb=4096, compute_dtype=jnp.bfloat16):
    """Pallas implementation of Net_qc_w.forward.

    x:      [B, K] float32
    params: PyTorch-native shapes: w1 [32, K], b1 [32], w2 [32, 32], b2 [32],
            w3 [C, 32], b3 [C]   (each Linear computes y = x @ W.T + b)
    tb:     max batch tile; rounded to a multiple of 128 when the batch is tiled.
    """
    w1, b1, w2, b2, w3, b3 = (
        params["w1"], params["b1"], params["w2"],
        params["b2"], params["w3"], params["b3"],
    )
    B, K = x.shape
    H1, H2, C = w1.shape[0], w2.shape[0], w3.shape[0]
    out_dtype = x.dtype

    tb_eff, b_pad = _select_tiles(B, tb)
    grid = (b_pad // tb_eff,)

    # Pad ragged batches; padded rows compute tanh(bias) and are sliced away.
    if b_pad != B:
        x = jnp.pad(x, ((0, b_pad - B), (0, 0)))

    # Tiny, trace-time weight prep (no per-batch HBM passes).
    w1c = w1.astype(compute_dtype)                    # [H1, K]
    w2c = w2.astype(compute_dtype)                    # [H2, H1]
    w3t = w3.T.astype(jnp.float32)                    # [H2, C]  (layer 3 in f32)
    b1c = b1.reshape(H1, 1).astype(jnp.float32)       # column bias (lane broadcast)
    b2c = b2.reshape(H2, 1).astype(jnp.float32)
    b3c = b3.reshape(1, C).astype(jnp.float32)        # row bias (sublane broadcast)

    resident = lambda shape: pl.BlockSpec(shape, lambda i: (0, 0))

    weight_bytes = (w1c.size * 2 + w2c.size * 2 + w3t.size * 4
                    + (H1 + H2 + C) * 4)
    cost = pl.CostEstimate(
        flops=2 * (K * H1 + H1 * H2 + H2 * C) * b_pad,
        transcendentals=(H1 + H2) * b_pad,
        bytes_accessed=b_pad * K * 4 + b_pad * C * 4 + weight_bytes,
    )

    out = pl.pallas_call(
        functools.partial(_mlp_kernel, compute_dtype=compute_dtype),
        out_shape=jax.ShapeDtypeStruct((b_pad, C), jnp.float32),
        grid_spec=pltpu.PrefetchScalarGridSpec(
            num_scalar_prefetch=0,
            grid=grid,
            in_specs=[
                pl.BlockSpec((tb_eff, K), lambda i: (i, 0)),  # x tile, native layout
                resident((H1, K)),                             # W1
                resident((H1, 1)),                             # b1
                resident((H2, H1)),                            # W2
                resident((H2, 1)),                             # b2
                resident((H2, C)),                             # W3^T
                resident((1, C)),                              # b3
            ],
            out_specs=pl.BlockSpec((tb_eff, C), lambda i: (i, 0)),
        ),
        compiler_params=pltpu.CompilerParams(
            dimension_semantics=("parallel",),   # megacore-shardable on v7x
        ),
        cost_estimate=cost,
    )(x, w1c, b1c, w2c, b2c, w3t, b3c)

    if b_pad != B:
        out = out[:B]
    return out.astype(out_dtype)


def init_params(key, K, C):
    """Deterministic init matching torch.nn.Linear shapes of Net_qc_w ([out, in])."""
    k1, k2, k3, k4, k5, k6 = jax.random.split(key, 6)
    s1 = 1.0 / jnp.sqrt(K)
    s2 = 1.0 / jnp.sqrt(32.0)
    return {
        "w1": jax.random.uniform(k1, (32, K), jnp.float32, -s1, s1),
        "b1": jax.random.uniform(k2, (32,), jnp.float32, -s1, s1),
        "w2": jax.random.uniform(k3, (32, 32), jnp.float32, -s2, s2),
        "b2": jax.random.uniform(k4, (32,), jnp.float32, -s2, s2),
        "w3": jax.random.uniform(k5, (C, 32), jnp.float32, -s2, s2),
        "b3": jax.random.uniform(k6, (C,), jnp.float32, -s2, s2),
    }


def reference_forward(x, p):
    # Exact torch semantics: y = x @ W.T + b per Linear layer, tanh between.
    y = jnp.tanh(x @ p["w1"].T + p["b1"])
    y = jnp.tanh(y @ p["w2"].T + p["b2"])
    return y @ p["w3"].T + p["b3"]


if __name__ == "__main__":
    K, C = 16, 10
    key = jax.random.PRNGKey(0)
    kp, kx1, kx2, kx3 = jax.random.split(key, 4)
    params = init_params(kp, K, C)

    # Tiny batch (single small tile, matches the module's tiny-batch usage).
    x_small = jax.random.normal(kx1, (8, K), jnp.float32)
    out_small = jax.block_until_ready(net_qc_w_forward(x_small, params))
    ref_small = reference_forward(x_small, params)
    assert out_small.shape == (8, C)
    assert jnp.allclose(out_small, ref_small, atol=5e-2, rtol=5e-2)

    # Ragged mid-size batch: single lane-dense tile + batch-padding path.
    x_mid = jax.random.normal(kx2, (200, K), jnp.float32)
    out_mid = jax.block_until_ready(net_qc_w_forward(x_mid, params))
    ref_mid = reference_forward(x_mid, params)
    assert out_mid.shape == (200, C)
    assert jnp.allclose(out_mid, ref_mid, atol=5e-2, rtol=5e-2)

    # Larger batch: exercises the even, >=4-step parallel grid.
    x_big = jax.random.normal(kx3, (2048, K), jnp.float32)
    out_big = jax.block_until_ready(net_qc_w_forward(x_big, params))
    ref_big = reference_forward(x_big, params)
    assert out_big.shape == (2048, C)
    assert jnp.allclose(out_big, ref_big, atol=5e-2, rtol=5e-2)

    print("KERNEL_OK")
</pallas_src>

<mosaic_0001>
module attributes {stable_mosaic.version = 11 : i64} {
  func.func @_mlp_kernel(%arg0: i32, %arg1: memref<8x16xf32, #tpu.memory_space<vmem>>, %arg2: memref<32x16xbf16, #tpu.memory_space<vmem>>, %arg3: memref<32x1xf32, #tpu.memory_space<vmem>>, %arg4: memref<32x32xbf16, #tpu.memory_space<vmem>>, %arg5: memref<32x1xf32, #tpu.memory_space<vmem>>, %arg6: memref<32x10xf32, #tpu.memory_space<vmem>>, %arg7: memref<1x10xf32, #tpu.memory_space<vmem>>, %arg8: memref<8x10xf32, #tpu.memory_space<vmem>>) attributes {dimension_semantics = [#tpu.dimension_semantics<parallel>], iteration_bounds = array<i64: 1>, scalar_prefetch = 0 : i64, scratch_operands = 0 : i64, tpu.core_type = #tpu.core_type<tc>, window_params = [{transform_indices = @transform_0, window_bounds = array<i64: 8, 16>}, {pipeline_mode = #tpu.pipeline_mode<synchronous>, transform_indices = @transform_1, window_bounds = array<i64: 32, 16>}, {pipeline_mode = #tpu.pipeline_mode<synchronous>, transform_indices = @transform_2, window_bounds = array<i64: 32, 1>}, {pipeline_mode = #tpu.pipeline_mode<synchronous>, transform_indices = @transform_3, window_bounds = array<i64: 32, 32>}, {pipeline_mode = #tpu.pipeline_mode<synchronous>, transform_indices = @transform_4, window_bounds = array<i64: 32, 1>}, {pipeline_mode = #tpu.pipeline_mode<synchronous>, transform_indices = @transform_5, window_bounds = array<i64: 32, 10>}, {pipeline_mode = #tpu.pipeline_mode<synchronous>, transform_indices = @transform_6, window_bounds = array<i64: 1, 10>}, {transform_indices = @transform_7, window_bounds = array<i64: 8, 10>}]} {
    %c0 = arith.constant 0 : index
    %c0_0 = arith.constant 0 : index
    %0 = vector.load %arg1[%c0, %c0_0] : memref<8x16xf32, #tpu.memory_space<vmem>>, vector<8x16xf32>
    %1 = arith.truncf %0 : vector<8x16xf32> to vector<8x16xbf16>
    %c0_1 = arith.constant 0 : index
    %c0_2 = arith.constant 0 : index
    %2 = vector.load %arg2[%c0_1, %c0_2] : memref<32x16xbf16, #tpu.memory_space<vmem>>, vector<32x16xbf16>
    %cst = arith.constant dense<0.000000e+00> : vector<32x8xf32>
    %3 = tpu.matmul %2, %1, %cst {dimension_numbers = #tpu.dot_dimension_numbers<[1], [1], [0], [0], [0, 0, 1, 0], [], []>} : vector<32x16xbf16>, vector<8x16xbf16>, vector<32x8xf32> -> vector<32x8xf32>
    %c0_3 = arith.constant 0 : index
    %c0_4 = arith.constant 0 : index
    %4 = vector.load %arg3[%c0_3, %c0_4] : memref<32x1xf32, #tpu.memory_space<vmem>>, vector<32x1xf32>
    %5 = vector.broadcast %4 : vector<32x1xf32> to vector<32x8xf32>
    %6 = arith.addf %3, %5 : vector<32x8xf32>
    %7 = math.tanh %6 : vector<32x8xf32>
    %8 = arith.truncf %7 : vector<32x8xf32> to vector<32x8xbf16>
    %c0_5 = arith.constant 0 : index
    %c0_6 = arith.constant 0 : index
    %9 = vector.load %arg4[%c0_5, %c0_6] : memref<32x32xbf16, #tpu.memory_space<vmem>>, vector<32x32xbf16>
    %cst_7 = arith.constant dense<0.000000e+00> : vector<32x8xf32>
    %10 = tpu.matmul %9, %8, %cst_7 {dimension_numbers = #tpu.dot_dimension_numbers<[1], [0], [0], [1], [0, 0, 1, 1], [], []>} : vector<32x32xbf16>, vector<32x8xbf16>, vector<32x8xf32> -> vector<32x8xf32>
    %c0_8 = arith.constant 0 : index
    %c0_9 = arith.constant 0 : index
    %11 = vector.load %arg5[%c0_8, %c0_9] : memref<32x1xf32, #tpu.memory_space<vmem>>, vector<32x1xf32>
    %12 = vector.broadcast %11 : vector<32x1xf32> to vector<32x8xf32>
    %13 = arith.addf %10, %12 : vector<32x8xf32>
    %14 = math.tanh %13 : vector<32x8xf32>
    %c0_10 = arith.constant 0 : index
    %c0_11 = arith.constant 0 : index
    %15 = vector.load %arg6[%c0_10, %c0_11] : memref<32x10xf32, #tpu.memory_space<vmem>>, vector<32x10xf32>
    %cst_12 = arith.constant dense<0.000000e+00> : vector<8x10xf32>
    %16 = tpu.matmul %14, %15, %cst_12 {dimension_numbers = #tpu.dot_dimension_numbers<[0], [0], [1], [1], [0, 1, 1, 1], [], []>} : vector<32x8xf32>, vector<32x10xf32>, vector<8x10xf32> -> vector<8x10xf32>
    %c0_13 = arith.constant 0 : index
    %c0_14 = arith.constant 0 : index
    %17 = vector.load %arg7[%c0_13, %c0_14] : memref<1x10xf32, #tpu.memory_space<vmem>>, vector<1x10xf32>
    %18 = vector.broadcast %17 : vector<1x10xf32> to vector<8x10xf32>
    %19 = arith.addf %16, %18 : vector<8x10xf32>
    %c0_15 = arith.constant 0 : index
    %c0_16 = arith.constant 0 : index
    %20 = vector.load %arg8[%c0_15, %c0_16] : memref<8x10xf32, #tpu.memory_space<vmem>>, vector<8x10xf32>
    tpu.vector_store %arg8[%c0_15, %c0_16], %19 {strides = array<i32>} : memref<8x10xf32, #tpu.memory_space<vmem>>, vector<8x10xf32>,
    return
  }
  func.func @transform_0(%arg0: i32) -> (i32, i32) {
    %c0_i32 = arith.constant 0 : i32
    %c0_i32_0 = arith.constant 0 : i32
    return %arg0, %c0_i32 : i32, i32
  }
  func.func @transform_1(%arg0: i32) -> (i32, i32) {
    %c0_i32 = arith.constant 0 : i32
    %c0_i32_0 = arith.constant 0 : i32
    %c0_i32_1 = arith.constant 0 : i32
    return %c0_i32, %c0_i32_0 : i32, i32
  }
  func.func @transform_2(%arg0: i32) -> (i32, i32) {
    %c0_i32 = arith.constant 0 : i32
    %c0_i32_0 = arith.constant 0 : i32
    %c0_i32_1 = arith.constant 0 : i32
    return %c0_i32, %c0_i32_0 : i32, i32
  }
  func.func @transform_3(%arg0: i32) -> (i32, i32) {
    %c0_i32 = arith.constant 0 : i32
    %c0_i32_0 = arith.constant 0 : i32
    %c0_i32_1 = arith.constant 0 : i32
    return %c0_i32, %c0_i32_0 : i32, i32
  }
  func.func @transform_4(%arg0: i32) -> (i32, i32) {
    %c0_i32 = arith.constant 0 : i32
    %c0_i32_0 = arith.constant 0 : i32
    %c0_i32_1 = arith.constant 0 : i32
    return %c0_i32, %c0_i32_0 : i32, i32
  }
  func.func @transform_5(%arg0: i32) -> (i32, i32) {
    %c0_i32 = arith.constant 0 : i32
    %c0_i32_0 = arith.constant 0 : i32
    %c0_i32_1 = arith.constant 0 : i32
    return %c0_i32, %c0_i32_0 : i32, i32
  }
  func.func @transform_6(%arg0: i32) -> (i32, i32) {
    %c0_i32 = arith.constant 0 : i32
    %c0_i32_0 = arith.constant 0 : i32
    %c0_i32_1 = arith.constant 0 : i32
    return %c0_i32, %c0_i32_0 : i32, i32
  }
  func.func @transform_7(%arg0: i32) -> (i32, i32) {
    %c0_i32 = arith.constant 0 : i32
    %c0_i32_0 = arith.constant 0 : i32
    return %arg0, %c0_i32 : i32, i32
  }
}

</mosaic_0001>

<llo_original>
// kernel: tpu_custom_call.1
$region0: #{tpu_custom_call.1}
  #allocation0 [shape = 'u32[]', space=smem, size = 0x4, offset = 0x4, fixed_abs, tag = 'smem constant byte address 0x4 - core index']
  #allocation1 [shape = 'u32[72,128]{1,0:T(1,128)}', space=vmem, size = 0x9000, scoped, tag = 'internal scratch']
  %s0 = inlined_call_operand.vmem [shape: f32[8,16], index: 0, kind: input, shape index: {}]
  %s1 = inlined_call_operand.vmem [shape: bf16[32,16], index: 1, kind: input, shape index: {}]
  %s2 = inlined_call_operand.vmem [shape: f32[32,1], index: 2, kind: input, shape index: {}]
  %s3 = inlined_call_operand.vmem [shape: bf16[32,32], index: 3, kind: input, shape index: {}]
  %s4 = inlined_call_operand.vmem [shape: f32[32,1], index: 4, kind: input, shape index: {}]
  %s5 = inlined_call_operand.vmem [shape: f32[32,10], index: 5, kind: input, shape index: {}]
  %s6 = inlined_call_operand.vmem [shape: f32[1,10], index: 6, kind: input, shape index: {}]
  %s7 = inlined_call_operand.hbm [shape: f32[8,10], index: 7, kind: output, shape index: {}]
  %s8 = sld [smem:[#allocation0]]
  $region38: #{tpu_custom_call.1} parent=0
    _
  %s10 = ssub.s32 1, %s8
  %s11 = scalar_select 0, %s10, %s8
  $region1: #{tpu_custom_call.1} parent=0
    #allocation2 [shape = 'u8[4096]{0}', space=vmem, size = 0x1000, scoped, tag = 'output window, operand 0, single buffered']
    #allocation3 [shape = 's32[1]{0}', space=sflag, size = 0x4, scoped, tag = 'scoped memory for tpu_custom_call.1']
    %12 = vsyncpa [#allocation3], 0
    // Predicated region
    $region2: #{tpu_custom_call.1} parent=1 // pred_check
      _
    $region3: #{tpu_custom_call.1} parent=1 // pred_check_branch
      %14 = sbr.rel (0) target = $region5
    $region4: #{tpu_custom_call.1} parent=1 // pred_region
      _
    $region5: #{tpu_custom_call.1} parent=1 // pred_fallthru
      _
    // Predicated region
    $region6: #{tpu_custom_call.1} parent=1 // pred_check
      _
    $region7: #{tpu_custom_call.1} parent=1 // pred_check_branch
      %16 = sbr.rel (0) target = $region9
    $region8: #{tpu_custom_call.1} parent=1 // pred_region
      _
    $region9: #{tpu_custom_call.1} parent=1 // pred_fallthru
      _
    // Predicated region
    $region10: #{tpu_custom_call.1} parent=1 // pred_check
      _
    $region11: #{tpu_custom_call.1} parent=1 // pred_check_branch
      %18 = sbr.rel (0) target = $region13
    $region12: #{tpu_custom_call.1} parent=1 // pred_region
      _
    $region13: #{tpu_custom_call.1} parent=1 // pred_fallthru
      _
    // Predicated region
    $region14: #{tpu_custom_call.1} parent=1 // pred_check
      _
    $region15: #{tpu_custom_call.1} parent=1 // pred_check_branch
      %20 = sbr.rel (0) target = $region17
    $region16: #{tpu_custom_call.1} parent=1 // pred_region
      _
    $region17: #{tpu_custom_call.1} parent=1 // pred_fallthru
      _
    // Predicated region
    $region18: #{tpu_custom_call.1} parent=1 // pred_check
      _
    $region19: #{tpu_custom_call.1} parent=1 // pred_check_branch
      %22 = sbr.rel (0) target = $region21
    $region20: #{tpu_custom_call.1} parent=1 // pred_region
      _
    $region21: #{tpu_custom_call.1} parent=1 // pred_fallthru
      _
    // Predicated region
    $region22: #{tpu_custom_call.1} parent=1 // pred_check
      _
    $region23: #{tpu_custom_call.1} parent=1 // pred_check_branch
      %24 = sbr.rel (0) target = $region25
    $region24: #{tpu_custom_call.1} parent=1 // pred_region
      _
    $region25: #{tpu_custom_call.1} parent=1 // pred_fallthru
      _
    // Predicated region
    $region26: #{tpu_custom_call.1} parent=1 // pred_check
      _
    $region27: #{tpu_custom_call.1} parent=1 // pred_check_branch
      %26 = sbr.rel (0) target = $region29
    $region28: #{tpu_custom_call.1} parent=1 // pred_region
      _
    $region29: #{tpu_custom_call.1} parent=1 // pred_fallthru
      _
    %v28 = vld [vmem:[%s0] sm:$0xff]
    %v29 = vpack.c.bf16 %v28, %v28
    %v30 = vld [vmem:[%s1] sm:$0xf]
    %v31 = vld [vmem:[%s1 + $0x4] sm:$0xf]
    %v32 = vld [vmem:[%s1 + $0x8] sm:$0xf]
    %v33 = vld [vmem:[%s1 + $0xc] sm:$0xf]
    %v34 = vld [vmem:[%s2] sm:$0xff]
    %v35 = vld [vmem:[%s2 + $0x8] sm:$0xff]
    %v36 = vld [vmem:[%s2 + $0x10] sm:$0xff]
    %v37 = vld [vmem:[%s2 + $0x18] sm:$0xff]
    %39 = vset.pattern.permute.xlu0 0
    %40 = vperm.xlu0 %39, %v34
    %v41 = vpop.permute.xlu0 %40
    %44 = vset.pattern.permute.xlu0 0
    %45 = vperm.xlu0 %44, %v35
    %v46 = vpop.permute.xlu0 %45
    %49 = vset.pattern.permute.xlu0 0
    %50 = vperm.xlu0 %49, %v36
    %v51 = vpop.permute.xlu0 %50
    %54 = vset.pattern.permute.xlu0 0
    %55 = vperm.xlu0 %54, %v37
    %v56 = vpop.permute.xlu0 %55
    %v62 = vunpack.c.l.b16 %v30
    %v63 = vunpack.c.l.b16 %v31
    %v64 = vunpack.c.l.b16 %v32
    %v65 = vunpack.c.l.b16 %v33
    %v66 = vpack.c.b16 %v63, %v62
    %v67 = vpack.c.b16 %v65, %v64
    %vm68 = vcmask 130048
    %v70 = vsel %vm68, %v66, 0
    %v73 = vsel %vm68, %v67, 0
    %v76 = vsel %vm68, %v29, 0
    %78 = vmatpush.bf16.xpose.msra.mxu0 0
    %79 = vmatpush.bf16.xpose.msra.mxu0 0
    %80 = vmatpush.bf16.xpose.msra.mxu0 0
    %81 = vmatpush.bf16.xpose.msra.mxu0 0
    %82 = vmatpush.bf16.xpose.msra.mxu0 0
    %83 = vmatpush.bf16.xpose.msra.mxu0 0
    %84 = vmatpush.bf16.xpose.msra.mxu0 0
    %85 = vmatpush.bf16.xpose.msra.mxu0 %v76
    %86 = vmatmul.bf16.gmra.mxu0 %v70
    %v87 = vpop.f32.mrf.mxu0
    %v88 = vadd.f32 %v41, %v87
    %v89 = vpop.f32.mrf.mxu0
    %v90 = vadd.f32 %v46, %v89
    %91 = vmatmul.bf16.gmra.mxu0 %v73
    %v92 = vpop.f32.mrf.mxu0
    %v93 = vadd.f32 %v51, %v92
    %v94 = vpop.f32.mrf.mxu0
    %v95 = vadd.f32 %v56, %v94
    %96 = vdwg.mxu0
    %v97 = vtanh.pop %v88
    %v98 = vtanh.pop %v90
    %v99 = vtanh.pop %v93
    %v100 = vtanh.pop %v95
    %v101 = vpack.c.bf16 %v98, %v97
    %v102 = vpack.c.bf16 %v100, %v99
    %v103 = vld [vmem:[%s3] sm:$0xf]
    %v104 = vld [vmem:[%s3 + $0x4] sm:$0xf]
    %v105 = vld [vmem:[%s3 + $0x8] sm:$0xf]
    %v106 = vld [vmem:[%s3 + $0xc] sm:$0xf]
    %v107 = vld [vmem:[%s4] sm:$0xff]
    %v108 = vld [vmem:[%s4 + $0x8] sm:$0xff]
    %v109 = vld [vmem:[%s4 + $0x10] sm:$0xff]
    %v110 = vld [vmem:[%s4 + $0x18] sm:$0xff]
    %112 = vset.pattern.permute.xlu0 0
    %113 = vperm.xlu0 %112, %v107
    %v114 = vpop.permute.xlu0 %113
    %117 = vset.pattern.permute.xlu0 0
    %118 = vperm.xlu0 %117, %v108
    %v119 = vpop.permute.xlu0 %118
    %122 = vset.pattern.permute.xlu0 0
    %123 = vperm.xlu0 %122, %v109
    %v124 = vpop.permute.xlu0 %123
    %127 = vset.pattern.permute.xlu0 0
    %128 = vperm.xlu0 %127, %v110
    %v129 = vpop.permute.xlu0 %128
    %v135 = vunpack.c.l.b16 %v103
    %v136 = vunpack.c.l.b16 %v104
    %v137 = vunpack.c.l.b16 %v105
    %v138 = vunpack.c.l.b16 %v106
    %v139 = vpack.c.b16 %v136, %v135
    %v140 = vpack.c.b16 %v138, %v137
    %vm141 = vcmask 261120
    %v143 = vsel %vm141, %v139, 0
    %v146 = vsel %vm141, %v140, 0
    %148 = vmatpush.bf16.msra.mxu0 0
    %149 = vmatpush.bf16.msra.mxu0 0
    %150 = vmatpush.bf16.msra.mxu0 0
    %151 = vmatpush.bf16.msra.mxu0 0
    %152 = vmatpush.bf16.msra.mxu0 0
    %153 = vmatpush.bf16.msra.mxu0 0
    %154 = vmatpush.bf16.msra.mxu0 %v102
    %155 = vmatpush.bf16.msra.mxu0 %v101
    %156 = vmatmul.bf16.gmra.mxu0 %v143
    %v157 = vpop.f32.mrf.mxu0
    %v158 = vadd.f32 %v114, %v157
    %v159 = vpop.f32.mrf.mxu0
    %v160 = vadd.f32 %v119, %v159
    %161 = vmatmul.bf16.gmra.mxu0 %v146
    %v162 = vpop.f32.mrf.mxu0
    %v163 = vadd.f32 %v124, %v162
    %v164 = vpop.f32.mrf.mxu0
    %v165 = vadd.f32 %v129, %v164
    %166 = vdwg.mxu0
    %v167 = vtanh.pop %v158
    %v168 = vtanh.pop %v160
    %v169 = vtanh.pop %v163
    %v170 = vtanh.pop %v165
    %v171 = vld [vmem:[%s5] sm:$0xff]
    %v172 = vld [vmem:[%s5 + $0x8] sm:$0xff]
    %v173 = vld [vmem:[%s5 + $0x10] sm:$0xff]
    %v174 = vld [vmem:[%s5 + $0x18] sm:$0xff]
    %v175 = vld [vmem:[%s6] sm:$0x1]
    %v177 = vperm.slane %v175, 0
    %179 = vxpose.xlu0.b32.start [1/16] %v167, 128
    %180 = vxpose.xlu0.b32.cont [2/16] %v168, 128
    %181 = vxpose.xlu0.b32.cont [3/16] %v169, 128
    %182 = vxpose.xlu0.b32.cont [4/16] %v170, 128
    %183 = vxpose.xlu0.b32.cont [5/16] 0.0, 128
    %184 = vxpose.xlu0.b32.cont [6/16] 0.0, 128
    %185 = vxpose.xlu0.b32.cont [7/16] 0.0, 128
    %186 = vxpose.xlu0.b32.cont [8/16] 0.0, 128
    %187 = vxpose.xlu0.b32.cont [9/16] 0.0, 128
    %188 = vxpose.xlu0.b32.cont [10/16] 0.0, 128
    %189 = vxpose.xlu0.b32.cont [11/16] 0.0, 128
    %190 = vxpose.xlu0.b32.cont [12/16] 0.0, 128
    %191 = vxpose.xlu0.b32.cont [13/16] 0.0, 128
    %192 = vxpose.xlu0.b32.cont [14/16] 0.0, 128
    %193 = vxpose.xlu0.b32.cont [15/16] 0.0, 128
    %194 = vxpose.xlu0.b32.end [16/16] 0.0, 128
    %v195 = vpop.trf.xlu0
    %v196 = vpop.trf.xlu0
    %v197 = vpop.trf.xlu0
    %v198 = vpop.trf.xlu0
    %v199 = vpop.trf.xlu0
    %v200 = vpop.trf.xlu0
    %v201 = vpop.trf.xlu0
    %v202 = vpop.trf.xlu0
    %v203 = vpop.trf.xlu0
    %v204 = vpop.trf.xlu0
    %v205 = vpop.trf.xlu0
    %v206 = vpop.trf.xlu0
    %v207 = vpop.trf.xlu0
    %v208 = vpop.trf.xlu0
    %v209 = vpop.trf.xlu0
    %v210 = vpop.trf.xlu0
    %v212 = vsel %vm141, %v195, 0
    %214 = vmatpush.msra.mxu0 0.0
    %215 = vmatpush.msra.mxu0 0.0
    %216 = vmatpush.msra.mxu0 0.0
    %217 = vmatpush.msra.mxu0 0.0
    %218 = vmatpush.msra.mxu0 0.0
    %219 = vmatpush.msra.mxu0 0.0
    %220 = vmatpush.msra.mxu0 0.0
    %221 = vmatpush.msra.mxu0 0.0
    %222 = vmatpush.msra.mxu0 0.0
    %223 = vmatpush.msra.mxu0 0.0
    %224 = vmatpush.msra.mxu0 0.0
    %225 = vmatpush.msra.mxu0 0.0
    %226 = vmatpush.msra.mxu0 %v174
    %227 = vmatpush.msra.mxu0 %v173
    %228 = vmatpush.msra.mxu0 %v172
    %229 = vmatpush.msra.mxu0 %v171
    %230 = vmatmul.f32.gmra.mxu0 %v212
    %v231 = vpop.f32.mrf.mxu0
    %v232 = vadd.f32 %v177, %v231
    %233 = vdwg.mxu0
    %vm234 = vcmask 80896
    %235 = vst.msk [vmem:[#allocation2] sm:$0xff] %vm234, %v232
    // Predicated region
    $region30: #{tpu_custom_call.1} parent=1 // pred_check
      _
    $region31: #{tpu_custom_call.1} parent=1 // pred_check_branch
      %237 = sbr.rel (0) target = $region33
    $region32: #{tpu_custom_call.1} parent=1 // pred_region
      %239 = vsyncadd [#allocation3], 0
      %s241 = sshll.u32 [#allocation2], 4
      %s242 = int_to_ptr.vmem [resolvable:$true] %s241
      %s243 = sshll.u32 %s7, 4
      %s244 = int_to_ptr.hbm [resolvable:$true] %s243
      %246 = dma.vmem_to_hbm [thread:$0]  %s242, 128, %s244, [#allocation3]
    $region33: #{tpu_custom_call.1} parent=1 // pred_fallthru
      _
    // Predicated region
    $region34: #{tpu_custom_call.1} parent=1 // pred_check
      _
    $region35: #{tpu_custom_call.1} parent=1 // pred_check_branch
      %248 = sbr.rel (0) target = $region37
    $region36: #{tpu_custom_call.1} parent=1 // pred_region
      %250 = dma.done [#allocation3], 128
    $region37: #{tpu_custom_call.1} parent=1 // pred_fallthru
      _
    %251 = vsyncpa [#allocation3], 1

</llo_original>
